<compile_context>
chip_gen: v7x
topology: tpu7x:2x2x1
jax: 0.10.0
libtpu: 0.0.40
codegen_flags: <defaults>
</compile_context>

<pallas_src>
import functools
import math
from itertools import combinations

import numpy as np
import jax
import jax.numpy as jnp
from jax.experimental import pallas as pl
from jax.experimental.pallas import tpu as pltpu

H = 32           # config.hidden_size
SEQ = 16         # encoder sequence length
BATCH = 2        # batch size
N_TARGETS = 2    # targets per instance
N_FACTS = 3      # facts per instance
LANES = 4 * H    # packed head width (4 heads x H) == 128 lanes

# Number of batch blocks (grid steps).  2 keeps both v7x TensorCores busy via
# dimension_semantics=("parallel",); set to 1 on single-TC v5e/v6e to fully
# collapse the grid (each grid step carries ~0.35us of fixed overhead).
N_BATCH_BLOCKS = 2


def _rup(x, m):
    return -(-x // m) * m


def _row_layout(nt, nf):
    ntf = nt * nf
    combos = tuple(combinations(range(nf), 2)) if nf > 1 else ()
    n_step = len(combos)
    n_abd = nf if nf > 1 else 0
    rows = 1 + ntf + n_step + n_abd          # cls | fact_cls | step | step_abd
    r_pad = max(8, _rup(rows, 8))
    head_of_row = [2] + [0] * ntf + [1] * n_step + [3] * n_abd
    return ntf, combos, n_step, n_abd, rows, r_pad, head_of_row


# ----------------------------------------------------------------------------
# Fused kernel: one grid step processes a whole batch block
# ----------------------------------------------------------------------------
def _controller_kernel(seq_ref, sel_ref, w_ref, bias_ref, o_ref, *,
                       bb, r_pad, nt, nf, ntf, n_step, n_abd, Rb):
    f32, bf16 = jnp.float32, jnp.bfloat16

    # 1) head-input rows: span pooling + feature assembly folded into one
    #    block-diagonal selection matmul ([PL;PR] stacked -> single MXU push).
    seq = seq_ref[...]                                                   # [SPb, H]
    X = jnp.dot(sel_ref[0:2 * Rb, :], seq, preferred_element_type=f32)   # [2Rb, H]
    xl, xr = X[0:Rb, :], X[Rb:2 * Rb, :]

    # 2) all four LinearsHead linear1's fused (bf16 MXU, f32 accum) + ReLU.
    w1t, w1b = w_ref[0:H, :], w_ref[H:2 * H, :]
    h = (jnp.dot(xl.astype(bf16), w1t, preferred_element_type=f32)
         + jnp.dot(xr.astype(bf16), w1b, preferred_element_type=f32)
         + bias_ref[0:1, :])                                             # [Rb, 4H]
    h = jnp.maximum(h, 0.0)

    # 3) all four linear2's: per-row head-block mask + lane-replicated w2 so
    #    the MXU result is already lane-dense per-row scores (no XLU reduce).
    w2a = w_ref[2 * H:2 * H + LANES, :]
    hmask = w_ref[2 * H + LANES:2 * H + LANES + r_pad, :].astype(f32)    # [r_pad, 4H]
    if bb > 1:
        hmask = jnp.concatenate([hmask] * bb, axis=0)
    scores = jnp.dot((h * hmask).astype(bf16), w2a,
                     preferred_element_type=f32)                         # [Rb, 4H]

    lam0, lam1 = bias_ref[1:2, :], bias_ref[2:3, :]
    b2_sent, b2_step = bias_ref[3:4, :], bias_ref[4:5, :]
    b2_state, b2_abd = bias_ref[5:6, :], bias_ref[6:7, :]
    fmask_full = sel_ref[2 * Rb:3 * Rb, :]                               # [Rb, SPb]

    # 4) epilogue per instance; the full output tile is composed in registers
    #    and written back with ONE full-width store.
    blocks = []
    for j in range(bb):
        r0 = j * r_pad
        blk = scores[r0:r0 + r_pad, :]
        cls_sig = jax.nn.sigmoid(blk[0:1, :] + b2_state)                 # statehead(cls)
        fact_sig = jax.nn.sigmoid(blk[1:1 + ntf, :] + b2_sent)           # sentsim scores
        fm = fmask_full[r0 + 1:r0 + 1 + ntf, 0:1]                        # [ntf, 1]
        fact_masked = fact_sig * fm
        # .view(nf, nt) groups consecutive chunks of nt flat (target-outer)
        # scores: max over each chunk, then mean over the nf maxima.
        gsum = jnp.max(fact_masked[0:nt, :], axis=0, keepdims=True)
        for i in range(1, nf):
            gsum = gsum + jnp.max(fact_masked[i * nt:(i + 1) * nt, :],
                                  axis=0, keepdims=True)
        pred_state = lam0 * (gsum * (1.0 / nf)) + lam1 * cls_sig         # [1, 4H]

        parts = [pred_state, fact_sig]
        used = 1 + ntf
        if nf > 1:
            raw = jnp.concatenate(
                [blk[1 + ntf:1 + ntf + n_step, :] + b2_step,
                 blk[1 + ntf + n_step:1 + ntf + n_step + n_abd, :] + b2_abd],
                axis=0)                                                  # [step|step_abd]
            m = jnp.max(raw, axis=0, keepdims=True)
            e = jnp.exp(raw - m)
            parts.append(e / jnp.sum(e, axis=0, keepdims=True))          # softmax_all
            used += n_step + n_abd
        if used < r_pad:
            parts.append(jnp.zeros((r_pad - used, LANES), f32))
        blocks.append(jnp.concatenate(parts, axis=0))                    # [r_pad, 4H]

    o_ref[...] = blocks[0] if bb == 1 else jnp.concatenate(blocks, axis=0)


# ----------------------------------------------------------------------------
# Parameter packing: 4 heads + lambda -> two DMA slabs (hoist out of per-call path)
# ----------------------------------------------------------------------------
def pack_controller_params(params, nt, nf):
    """Pack once per parameter set and reuse across score_instance calls."""
    ntf, _, n_step, n_abd, _, r_pad, head_of_row = _row_layout(nt, nf)
    heads = ("sentsim", "stephead", "statehead", "stephead_abd")
    f32 = jnp.float32

    zs = jnp.zeros((H, H), f32)
    # linear1, split into left/right halves of the concatenated [2H] input.
    w1t = jnp.concatenate([params["sentsim"]["w1"][:H],
                           params["stephead"]["w1"][:H],
                           params["statehead"]["w1"],
                           params["stephead_abd"]["w1"][:H]], axis=1)        # [H, 4H]
    w1b = jnp.concatenate([params["sentsim"]["w1"][H:],
                           params["stephead"]["w1"][H:],
                           zs,
                           params["stephead_abd"]["w1"][H:]], axis=1)        # [H, 4H]
    # linear2, lane-replicated: row k holds w2_{k//H}[k%H] in every lane, so
    # (h * head_mask) @ w2_all is already lane-dense.
    w2_rows = jnp.concatenate([params[hd]["w2"].reshape(H) for hd in heads])  # [4H]
    w2_all = jnp.broadcast_to(w2_rows[:, None], (LANES, LANES))
    # per-row head-block mask (row r keeps only its head's hidden lanes)
    hmask = np.zeros((r_pad, LANES), np.float32)
    for r, hd in enumerate(head_of_row):
        hmask[r, hd * H:(hd + 1) * H] = 1.0
    wslab = jnp.concatenate([w1t, w1b, w2_all, jnp.asarray(hmask)],
                            axis=0).astype(jnp.bfloat16)                      # [192+r_pad, 4H]

    b1 = jnp.concatenate([params[hd]["b1"] for hd in heads], axis=1)          # [1, 4H]
    lam = jax.nn.softmax(params["lambda_weight"])                             # [2]
    b2 = jnp.stack([params[hd]["b2"].reshape(()) for hd in heads])            # [4]
    scal = jnp.concatenate([lam, b2, jnp.zeros((1,), f32)])                   # [7]
    bias_slab = jnp.concatenate(
        [b1, jnp.broadcast_to(scal[:, None], (7, LANES))], axis=0)            # [8, 4H]
    return {"wslab": wslab, "bias_slab": bias_slab, "nt": nt, "nf": nf}


# ----------------------------------------------------------------------------
# Fused forward builder (cached on the static layout)
# ----------------------------------------------------------------------------
@functools.lru_cache(maxsize=None)
def _make_fwd(nt, nf, seq_len, batch, n_blocks):
    ntf, combos, n_step, n_abd, _, r_pad, _ = _row_layout(nt, nf)
    bb = batch // n_blocks
    Rb = bb * r_pad
    sp = _rup(seq_len + 1, 8)                 # sequence + cls row, padded
    SPb = bb * sp
    WROWS = 2 * H + LANES + r_pad

    kernel = functools.partial(_controller_kernel, bb=bb, r_pad=r_pad, nt=nt,
                               nf=nf, ntf=ntf, n_step=n_step, n_abd=n_abd, Rb=Rb)

    call = pl.pallas_call(
        kernel,
        grid=(n_blocks,),
        in_specs=[
            pl.BlockSpec((None, SPb, H), lambda g: (g, 0, 0)),       # activations
            pl.BlockSpec((None, 3 * Rb, SPb), lambda g: (g, 0, 0)),  # PL | PR | fmask slab
            pl.BlockSpec((WROWS, LANES), lambda g: (0, 0)),          # bf16 weight slab
            pl.BlockSpec((8, LANES), lambda g: (0, 0)),              # f32 bias/scalar slab
        ],
        out_specs=pl.BlockSpec((None, Rb, LANES), lambda g: (g, 0, 0)),
        out_shape=jax.ShapeDtypeStruct((n_blocks, Rb, LANES), jnp.float32),
        compiler_params=pltpu.CompilerParams(
            dimension_semantics=("parallel",)),
    )

    @jax.jit
    def fwd(cls_features, last_hidden, sel_slab, wslab, bias_slab):
        b = cls_features.shape[0]
        pad_rows = sp - (seq_len + 1)
        seq_ext = jnp.concatenate(
            [last_hidden.astype(jnp.float32),
             cls_features[:, None, :].astype(jnp.float32),
             jnp.zeros((b, pad_rows, H), jnp.float32)], axis=1)       # [B, sp, H]
        seq_all = seq_ext.reshape(n_blocks, SPb, H)

        out = call(seq_all, sel_slab, wslab, bias_slab)               # [n_blocks, Rb, 4H]
        out = out.reshape(batch, r_pad, LANES)

        state = out[:, 0, 0]
        fact = out[:, 1:1 + ntf, 0]
        if nf > 1:
            step = out[:, 1 + ntf:1 + ntf + n_step, 0]
            step_abd = out[:, 1 + ntf + n_step:1 + ntf + n_step + n_abd, 0]
        else:
            step, step_abd = None, None
        return state, fact, step, step_abd

    layout = dict(n_blocks=n_blocks, bb=bb, r_pad=r_pad, Rb=Rb, sp=sp, SPb=SPb,
                  ntf=ntf, n_step=n_step, n_abd=n_abd, combos=combos)
    return fwd, layout


# ----------------------------------------------------------------------------
# Host metadata -> block-diagonal selection slab (PL | PR | fact-mask rows)
# ----------------------------------------------------------------------------
def _build_batch_consts(batch_info, nt, nf, seq_len, layout):
    n_blocks, bb = layout["n_blocks"], layout["bb"]
    r_pad, Rb = layout["r_pad"], layout["Rb"]
    sp, SPb = layout["sp"], layout["SPb"]
    ntf, n_step, n_abd = layout["ntf"], layout["n_step"], layout["n_abd"]
    combos = layout["combos"]

    slab = np.zeros((n_blocks, 3 * Rb, SPb), np.float32)
    for bi, info in enumerate(batch_info):
        g, j = divmod(bi, bb)
        r0, c0 = j * r_pad, j * sp
        PL = slab[g, 0:Rb]
        PR = slab[g, Rb:2 * Rb]
        FM = slab[g, 2 * Rb:3 * Rb]
        t_off = info["target_offsets"]
        f_off = info["fact_offsets"]

        PL[r0, c0 + seq_len] = 1.0                          # statehead(cls) row
        for k in range(ntf):                                # cat(fact_f, target_t); k = t*nf+f
            t, f = k // nf, k % nf
            lo, hi = f_off[f]; PL[r0 + 1 + k, c0 + lo:c0 + hi] = 1.0 / (hi - lo)
            lo, hi = t_off[t]; PR[r0 + 1 + k, c0 + lo:c0 + hi] = 1.0 / (hi - lo)
        for c, (i1, i2) in enumerate(combos):               # cat(fact_i1, fact_i2)
            lo, hi = f_off[i1]; PL[r0 + 1 + ntf + c, c0 + lo:c0 + hi] = 1.0 / (hi - lo)
            lo, hi = f_off[i2]; PR[r0 + 1 + ntf + c, c0 + lo:c0 + hi] = 1.0 / (hi - lo)
        for i in range(n_abd):                              # cat(target_mean, fact_i)
            r = r0 + 1 + ntf + n_step + i
            for lo, hi in t_off:
                PL[r, c0 + lo:c0 + hi] += 1.0 / (nt * (hi - lo))
            lo, hi = f_off[i]; PR[r, c0 + lo:c0 + hi] = 1.0 / (hi - lo)
        fm = np.asarray(info["fact_score_mask"], np.float32).reshape(ntf)
        FM[r0 + 1:r0 + 1 + ntf, :] = fm[:, None]
    return jnp.asarray(slab)


# ----------------------------------------------------------------------------
# Controller.score_instance (state_method='fact_cls_learn', step_func='softmax_all')
# ----------------------------------------------------------------------------
def score_instance(params, encoder_outputs, batch_info, packed_params=None):
    cls_features = encoder_outputs["pooler_output"]          # [B, H]
    last_hidden = encoder_outputs["last_hidden_state"]       # [B, S, H]
    batch, seq_len, _ = last_hidden.shape
    nt = len(batch_info[0]["target_offsets"])
    nf = len(batch_info[0]["fact_offsets"])
    # TODO(synk): assumes every instance shares (nt, nf); ragged batches would
    # need per-instance padding inside the selection slab.
    assert all(len(i["target_offsets"]) == nt and len(i["fact_offsets"]) == nf
               for i in batch_info)

    n_blocks = (N_BATCH_BLOCKS
                if (batch >= N_BATCH_BLOCKS and batch % N_BATCH_BLOCKS == 0)
                else 1)
    fwd, layout = _make_fwd(nt, nf, seq_len, batch, n_blocks)

    if packed_params is None:
        # Prefer packing once per parameter set via pack_controller_params and
        # reusing it; done here only as a fallback.
        packed_params = pack_controller_params(params, nt, nf)
    sel_slab = _build_batch_consts(batch_info, nt, nf, seq_len, layout)

    state, fact, step, step_abd = fwd(cls_features, last_hidden, sel_slab,
                                      packed_params["wslab"],
                                      packed_params["bias_slab"])

    none_list = [None] * batch
    return {
        "batch_pred_state_score": [state[b] for b in range(batch)],
        "batch_pred_fact_score": [fact[b] for b in range(batch)],
        "batch_pred_step_score": ([step[b] for b in range(batch)]
                                  if step is not None else none_list),
        "batch_pred_step_abd_score": ([step_abd[b] for b in range(batch)]
                                      if step_abd is not None else none_list),
    }


# ----------------------------------------------------------------------------
# Parameter construction (mirrors nn.Linear default init; weights stored [in, out])
# ----------------------------------------------------------------------------
def init_linears_head(key, input_num):
    din = input_num * H
    k1, k2, k3, k4 = jax.random.split(key, 4)
    bound1 = 1.0 / math.sqrt(din)
    bound2 = 1.0 / math.sqrt(H)
    return {
        "w1": jax.random.uniform(k1, (din, H), jnp.float32, -bound1, bound1),
        "b1": jax.random.uniform(k2, (1, H), jnp.float32, -bound1, bound1),
        "w2": jax.random.uniform(k3, (1, H), jnp.float32, -bound2, bound2),
        "b2": jax.random.uniform(k4, (1, 1), jnp.float32, -bound2, bound2),
    }


def init_controller_params(key):
    ks = jax.random.split(key, 4)
    return {
        "sentsim": init_linears_head(ks[0], input_num=2),
        "stephead": init_linears_head(ks[1], input_num=2),
        "statehead": init_linears_head(ks[2], input_num=1),
        "stephead_abd": init_linears_head(ks[3], input_num=2),
        "lambda_weight": jnp.array([0.5, 0.5], jnp.float32),  # fact_cls_learn
    }


# ----------------------------------------------------------------------------
# Driver
# ----------------------------------------------------------------------------
if __name__ == "__main__":
    key = jax.random.PRNGKey(0)
    k_params, k_cls, k_seq = jax.random.split(key, 3)

    params = init_controller_params(k_params)

    # synthetic (deterministic) encoder outputs standing in for AutoModel
    encoder_outputs = {
        "pooler_output": jax.random.normal(k_cls, (BATCH, H), jnp.float32),
        "last_hidden_state": jax.random.normal(k_seq, (BATCH, SEQ, H), jnp.float32),
    }

    # static span bookkeeping (host-side metadata in the original module)
    per_instance_info = {
        "target_offsets": [(0, 3), (3, 6)],
        "fact_offsets": [(6, 9), (9, 12), (12, 15)],
        "fact_score_mask": [1.0] * (N_FACTS * N_TARGETS),
    }
    batch_info = [per_instance_info for _ in range(BATCH)]

    # pack the head weights / lambda once (hoisted off the per-call path)
    packed = pack_controller_params(params, N_TARGETS, N_FACTS)

    out = score_instance(params, encoder_outputs, batch_info, packed_params=packed)

    for key_ in out:
        for v in out[key_]:
            if v is not None:
                jax.block_until_ready(v)

    print("KERNEL_OK")
</pallas_src>

<mosaic_0001>
module attributes {stable_mosaic.version = 11 : i64} {
  func.func @_controller_kernel(%arg0: i32, %arg1: memref<1x24x32xf32, #tpu.memory_space<vmem>>, %arg2: memref<1x48x24xf32, #tpu.memory_space<vmem>>, %arg3: memref<208x128xbf16, #tpu.memory_space<vmem>>, %arg4: memref<8x128xf32, #tpu.memory_space<vmem>>, %arg5: memref<1x16x128xf32, #tpu.memory_space<vmem>>) attributes {dimension_semantics = [#tpu.dimension_semantics<parallel>], iteration_bounds = array<i64: 2>, scalar_prefetch = 0 : i64, scratch_operands = 0 : i64, tpu.core_type = #tpu.core_type<tc>, window_params = [{transform_indices = @transform_0, window_bounds = array<i64: 1, 24, 32>}, {transform_indices = @transform_1, window_bounds = array<i64: 1, 48, 24>}, {pipeline_mode = #tpu.pipeline_mode<synchronous>, transform_indices = @transform_2, window_bounds = array<i64: 208, 128>}, {pipeline_mode = #tpu.pipeline_mode<synchronous>, transform_indices = @transform_3, window_bounds = array<i64: 8, 128>}, {transform_indices = @transform_4, window_bounds = array<i64: 1, 16, 128>}]} {
    %c0 = arith.constant 0 : index
    %c0_0 = arith.constant 0 : index
    %c0_1 = arith.constant 0 : index
    %0 = vector.load %arg1[%c0, %c0_0, %c0_1] : memref<1x24x32xf32, #tpu.memory_space<vmem>>, vector<1x24x32xf32>
    %1 = vector.shape_cast %0 : vector<1x24x32xf32> to vector<24x32xf32>
    %c0_2 = arith.constant 0 : index
    %c0_3 = arith.constant 0 : index
    %c0_4 = arith.constant 0 : index
    %2 = vector.load %arg2[%c0_2, %c0_3, %c0_4] : memref<1x48x24xf32, #tpu.memory_space<vmem>>, vector<1x32x24xf32>
    %3 = vector.shape_cast %2 : vector<1x32x24xf32> to vector<32x24xf32>
    %cst = arith.constant dense<0.000000e+00> : vector<32x32xf32>
    %4 = tpu.matmul %3, %1, %cst {dimension_numbers = #tpu.dot_dimension_numbers<[1], [0], [0], [1], [0, 0, 1, 1], [], []>} : vector<32x24xf32>, vector<24x32xf32>, vector<32x32xf32> -> vector<32x32xf32>
    %5 = vector.extract_strided_slice %4 {offsets = [0, 0], sizes = [16, 32], strides = [1, 1]} : vector<32x32xf32> to vector<16x32xf32>
    %6 = vector.extract_strided_slice %4 {offsets = [16, 0], sizes = [16, 32], strides = [1, 1]} : vector<32x32xf32> to vector<16x32xf32>
    %c0_5 = arith.constant 0 : index
    %c0_6 = arith.constant 0 : index
    %7 = vector.load %arg3[%c0_5, %c0_6] : memref<208x128xbf16, #tpu.memory_space<vmem>>, vector<32x128xbf16>
    %c32 = arith.constant 32 : index
    %c0_7 = arith.constant 0 : index
    %8 = vector.load %arg3[%c32, %c0_7] : memref<208x128xbf16, #tpu.memory_space<vmem>>, vector<32x128xbf16>
    %9 = arith.truncf %5 : vector<16x32xf32> to vector<16x32xbf16>
    %cst_8 = arith.constant dense<0.000000e+00> : vector<16x128xf32>
    %10 = tpu.matmul %9, %7, %cst_8 {dimension_numbers = #tpu.dot_dimension_numbers<[1], [0], [0], [1], [0, 0, 1, 1], [], []>} : vector<16x32xbf16>, vector<32x128xbf16>, vector<16x128xf32> -> vector<16x128xf32>
    %11 = arith.truncf %6 : vector<16x32xf32> to vector<16x32xbf16>
    %cst_9 = arith.constant dense<0.000000e+00> : vector<16x128xf32>
    %12 = tpu.matmul %11, %8, %cst_9 {dimension_numbers = #tpu.dot_dimension_numbers<[1], [0], [0], [1], [0, 0, 1, 1], [], []>} : vector<16x32xbf16>, vector<32x128xbf16>, vector<16x128xf32> -> vector<16x128xf32>
    %13 = arith.addf %10, %12 : vector<16x128xf32>
    %c0_10 = arith.constant 0 : index
    %c0_11 = arith.constant 0 : index
    %14 = vector.load %arg4[%c0_10, %c0_11] : memref<8x128xf32, #tpu.memory_space<vmem>>, vector<1x128xf32>
    %15 = vector.broadcast %14 : vector<1x128xf32> to vector<16x128xf32>
    %16 = arith.addf %13, %15 : vector<16x128xf32>
    %cst_12 = arith.constant 0.000000e+00 : f32
    %17 = vector.broadcast %cst_12 : f32 to vector<16x128xf32>
    %18 = arith.maximumf %16, %17 : vector<16x128xf32>
    %c64 = arith.constant 64 : index
    %c0_13 = arith.constant 0 : index
    %19 = vector.load %arg3[%c64, %c0_13] : memref<208x128xbf16, #tpu.memory_space<vmem>>, vector<128x128xbf16>
    %c192 = arith.constant 192 : index
    %c0_14 = arith.constant 0 : index
    %20 = vector.load %arg3[%c192, %c0_14] : memref<208x128xbf16, #tpu.memory_space<vmem>>, vector<16x128xbf16>
    %21 = arith.extf %20 : vector<16x128xbf16> to vector<16x128xf32>
    %22 = arith.mulf %18, %21 : vector<16x128xf32>
    %23 = arith.truncf %22 : vector<16x128xf32> to vector<16x128xbf16>
    %cst_15 = arith.constant dense<0.000000e+00> : vector<16x128xf32>
    %24 = tpu.matmul %23, %19, %cst_15 {dimension_numbers = #tpu.dot_dimension_numbers<[1], [0], [0], [1], [0, 0, 1, 1], [], []>} : vector<16x128xbf16>, vector<128x128xbf16>, vector<16x128xf32> -> vector<16x128xf32>
    %c1 = arith.constant 1 : index
    %c0_16 = arith.constant 0 : index
    %25 = vector.load %arg4[%c1, %c0_16] : memref<8x128xf32, #tpu.memory_space<vmem>>, vector<1x128xf32>
    %c2 = arith.constant 2 : index
    %c0_17 = arith.constant 0 : index
    %26 = vector.load %arg4[%c2, %c0_17] : memref<8x128xf32, #tpu.memory_space<vmem>>, vector<1x128xf32>
    %c3 = arith.constant 3 : index
    %c0_18 = arith.constant 0 : index
    %27 = vector.load %arg4[%c3, %c0_18] : memref<8x128xf32, #tpu.memory_space<vmem>>, vector<1x128xf32>
    %c4 = arith.constant 4 : index
    %c0_19 = arith.constant 0 : index
    %28 = vector.load %arg4[%c4, %c0_19] : memref<8x128xf32, #tpu.memory_space<vmem>>, vector<1x128xf32>
    %c5 = arith.constant 5 : index
    %c0_20 = arith.constant 0 : index
    %29 = vector.load %arg4[%c5, %c0_20] : memref<8x128xf32, #tpu.memory_space<vmem>>, vector<1x128xf32>
    %c6 = arith.constant 6 : index
    %c0_21 = arith.constant 0 : index
    %30 = vector.load %arg4[%c6, %c0_21] : memref<8x128xf32, #tpu.memory_space<vmem>>, vector<1x128xf32>
    %c0_22 = arith.constant 0 : index
    %c32_23 = arith.constant 32 : index
    %c0_24 = arith.constant 0 : index
    %31 = vector.load %arg2[%c0_22, %c32_23, %c0_24] : memref<1x48x24xf32, #tpu.memory_space<vmem>>, vector<1x16x24xf32>
    %32 = vector.shape_cast %31 : vector<1x16x24xf32> to vector<16x24xf32>
    %33 = vector.extract_strided_slice %24 {offsets = [0, 0], sizes = [1, 128], strides = [1, 1]} : vector<16x128xf32> to vector<1x128xf32>
    %34 = arith.addf %33, %29 : vector<1x128xf32>
    %35 = arith.negf %34 : vector<1x128xf32>
    %36 = math.exp %35 : vector<1x128xf32>
    %cst_25 = arith.constant 1.000000e+00 : f32
    %37 = vector.broadcast %cst_25 : f32 to vector<1x128xf32>
    %38 = arith.addf %37, %36 : vector<1x128xf32>
    %39 = arith.divf %37, %38 : vector<1x128xf32>
    %40 = vector.extract_strided_slice %24 {offsets = [1, 0], sizes = [6, 128], strides = [1, 1]} : vector<16x128xf32> to vector<6x128xf32>
    %41 = vector.broadcast %27 : vector<1x128xf32> to vector<6x128xf32>
    %42 = arith.addf %40, %41 : vector<6x128xf32>
    %43 = arith.negf %42 : vector<6x128xf32>
    %44 = math.exp %43 : vector<6x128xf32>
    %cst_26 = arith.constant 1.000000e+00 : f32
    %45 = vector.broadcast %cst_26 : f32 to vector<6x128xf32>
    %46 = arith.addf %45, %44 : vector<6x128xf32>
    %47 = arith.divf %45, %46 : vector<6x128xf32>
    %48 = vector.extract_strided_slice %32 {offsets = [1, 0], sizes = [6, 1], strides = [1, 1]} : vector<16x24xf32> to vector<6x1xf32>
    %49 = vector.broadcast %48 : vector<6x1xf32> to vector<6x128xf32>
    %50 = arith.mulf %47, %49 : vector<6x128xf32>
    %51 = vector.extract_strided_slice %50 {offsets = [0, 0], sizes = [2, 128], strides = [1, 1]} : vector<6x128xf32> to vector<2x128xf32>
    %cst_27 = arith.constant dense<0xFF800000> : vector<128xf32>
    %52 = vector.multi_reduction <maximumf>, %51, %cst_27 [0] : vector<2x128xf32> to vector<128xf32>
    %53 = vector.shape_cast %52 : vector<128xf32> to vector<1x128xf32>
    %54 = vector.extract_strided_slice %50 {offsets = [2, 0], sizes = [2, 128], strides = [1, 1]} : vector<6x128xf32> to vector<2x128xf32>
    %cst_28 = arith.constant dense<0xFF800000> : vector<128xf32>
    %55 = vector.multi_reduction <maximumf>, %54, %cst_28 [0] : vector<2x128xf32> to vector<128xf32>
    %56 = vector.shape_cast %55 : vector<128xf32> to vector<1x128xf32>
    %57 = arith.addf %53, %56 : vector<1x128xf32>
    %58 = vector.extract_strided_slice %50 {offsets = [4, 0], sizes = [2, 128], strides = [1, 1]} : vector<6x128xf32> to vector<2x128xf32>
    %cst_29 = arith.constant dense<0xFF800000> : vector<128xf32>
    %59 = vector.multi_reduction <maximumf>, %58, %cst_29 [0] : vector<2x128xf32> to vector<128xf32>
    %60 = vector.shape_cast %59 : vector<128xf32> to vector<1x128xf32>
    %61 = arith.addf %57, %60 : vector<1x128xf32>
    %cst_30 = arith.constant 0.333333343 : f32
    %62 = vector.broadcast %cst_30 : f32 to vector<1x128xf32>
    %63 = arith.mulf %61, %62 : vector<1x128xf32>
    %64 = arith.mulf %25, %63 : vector<1x128xf32>
    %65 = arith.mulf %26, %39 : vector<1x128xf32>
    %66 = arith.addf %64, %65 : vector<1x128xf32>
    %67 = vector.extract_strided_slice %24 {offsets = [7, 0], sizes = [3, 128], strides = [1, 1]} : vector<16x128xf32> to vector<3x128xf32>
    %68 = vector.broadcast %28 : vector<1x128xf32> to vector<3x128xf32>
    %69 = arith.addf %67, %68 : vector<3x128xf32>
    %70 = vector.extract_strided_slice %24 {offsets = [10, 0], sizes = [3, 128], strides = [1, 1]} : vector<16x128xf32> to vector<3x128xf32>
    %71 = vector.broadcast %30 : vector<1x128xf32> to vector<3x128xf32>
    %72 = arith.addf %70, %71 : vector<3x128xf32>
    %73 = tpu.concatenate %69, %72 in 0 : vector<3x128xf32>, vector<3x128xf32> -> vector<6x128xf32>
    %cst_31 = arith.constant dense<0xFF800000> : vector<128xf32>
    %74 = vector.multi_reduction <maximumf>, %73, %cst_31 [0] : vector<6x128xf32> to vector<128xf32>
    %75 = vector.shape_cast %74 : vector<128xf32> to vector<1x128xf32>
    %76 = vector.broadcast %75 : vector<1x128xf32> to vector<6x128xf32>
    %77 = arith.subf %73, %76 : vector<6x128xf32>
    %78 = math.exp %77 : vector<6x128xf32>
    %cst_32 = arith.constant dense<0.000000e+00> : vector<128xf32>
    %79 = vector.multi_reduction <add>, %78, %cst_32 [0] : vector<6x128xf32> to vector<128xf32>
    %80 = vector.shape_cast %79 : vector<128xf32> to vector<1x128xf32>
    %81 = vector.broadcast %80 : vector<1x128xf32> to vector<6x128xf32>
    %82 = arith.divf %78, %81 : vector<6x128xf32>
    %cst_33 = arith.constant 0.000000e+00 : f32
    %83 = vector.broadcast %cst_33 : f32 to vector<3x128xf32>
    %84 = tpu.concatenate %66, %47, %82, %83 in 0 : vector<1x128xf32>, vector<6x128xf32>, vector<6x128xf32>, vector<3x128xf32> -> vector<16x128xf32>
    %c0_34 = arith.constant 0 : index
    %c0_35 = arith.constant 0 : index
    %c0_36 = arith.constant 0 : index
    %85 = vector.load %arg5[%c0_34, %c0_35, %c0_36] : memref<1x16x128xf32, #tpu.memory_space<vmem>>, vector<1x16x128xf32>
    %86 = vector.shape_cast %85 : vector<1x16x128xf32> to vector<16x128xf32>
    %87 = vector.shape_cast %84 : vector<16x128xf32> to vector<1x16x128xf32>
    tpu.vector_store %arg5[%c0_34, %c0_35, %c0_36], %87 {strides = array<i32>} : memref<1x16x128xf32, #tpu.memory_space<vmem>>, vector<1x16x128xf32>,
    return
  }
  func.func @transform_0(%arg0: i32) -> (i32, i32, i32) {
    %c0_i32 = arith.constant 0 : i32
    %c0_i32_0 = arith.constant 0 : i32
    %c0_i32_1 = arith.constant 0 : i32
    return %arg0, %c0_i32, %c0_i32_0 : i32, i32, i32
  }
  func.func @transform_1(%arg0: i32) -> (i32, i32, i32) {
    %c0_i32 = arith.constant 0 : i32
    %c0_i32_0 = arith.constant 0 : i32
    %c0_i32_1 = arith.constant 0 : i32
    return %arg0, %c0_i32, %c0_i32_0 : i32, i32, i32
  }
  func.func @transform_2(%arg0: i32) -> (i32, i32) {
    %c0_i32 = arith.constant 0 : i32
    %c0_i32_0 = arith.constant 0 : i32
    %c0_i32_1 = arith.constant 0 : i32
    return %c0_i32, %c0_i32_0 : i32, i32
  }
  func.func @transform_3(%arg0: i32) -> (i32, i32) {
    %c0_i32 = arith.constant 0 : i32
    %c0_i32_0 = arith.constant 0 : i32
    %c0_i32_1 = arith.constant 0 : i32
    return %c0_i32, %c0_i32_0 : i32, i32
  }
  func.func @transform_4(%arg0: i32) -> (i32, i32, i32) {
    %c0_i32 = arith.constant 0 : i32
    %c0_i32_0 = arith.constant 0 : i32
    %c0_i32_1 = arith.constant 0 : i32
    return %arg0, %c0_i32, %c0_i32_0 : i32, i32, i32
  }
}

</mosaic_0001>

<llo_original>
// kernel: fwd.1
$region0: #{fwd.1}
  #allocation0 [shape = 'u32[]', space=smem, size = 0x4, offset = 0x4, fixed_abs, tag = 'smem constant byte address 0x4 - core index']
  #allocation1 [shape = 'u32[144,128]{1,0:T(1,128)}', space=vmem, size = 0x12000, scoped, tag = 'internal scratch']
  %s0 = inlined_call_operand.vmem [shape: f32[2,24,32], index: 0, kind: input, shape index: {}]
  %s1 = inlined_call_operand.vmem [shape: f32[2,48,24], index: 1, kind: input, shape index: {}]
  %s2 = inlined_call_operand.vmem [shape: bf16[208,128], index: 2, kind: input, shape index: {}]
  %s3 = inlined_call_operand.vmem [shape: f32[8,128], index: 3, kind: input, shape index: {}]
  %s4 = inlined_call_operand.vmem [shape: f32[2,16,128], index: 4, kind: output, shape index: {}]
  %s5 = sld [smem:[#allocation0]]
  $region49: #{fwd.1} parent=0
    _
  %s7 = ssub.s32 1, %s5
  %s8 = scalar_select 0, %s7, %s5
  loop: start=0, step=1, limit=4
  $region2: #{fwd.1} parent=0 // loop_pre_header
    _
  $region3: #{fwd.1} parent=0 // loop_header
    %s10 = sphi 0, %s14
    %p11 = scmp.ge.s32.totalorder %s10, 4
    %s20 = sphi 0, %s22
    %s23 = sphi 0, %s20
    %s24 = sphi 0, %s23
    %s40 = sphi 0, %s24
    %s46 = sphi 0, %s48
    %s49 = sphi 0, %s46
    %s50 = sphi 0, %s49
    %s66 = sphi 0, %s50
    %s70 = sphi 0, %s70
    %s72 = sphi 0, %s70
    %s73 = sphi 0, %s72
    %s87 = sphi 0, %s73
    %s91 = sphi 0, %s91
    %s93 = sphi 0, %s91
    %s94 = sphi 0, %s93
    %s108 = sphi 0, %s94
    %s114 = sphi 0, %s116
    %s117 = sphi 0, %s114
    %s118 = sphi 0, %s117
    %s134 = sphi 0, %s118
  $region4: #{fwd.1} parent=0 // loop_header_branch
    %13 = sbr.rel (%p11) target = $region8
  $region5: #{fwd.1} parent=0 // loop_body
    %s15 = ssub.s32 %s10, 1
    %s16 = ssub.s32 %s10, 2
    %s17 = sadd.s32 %s10, 1
    %s18 = ssub.s32 %s10, %s17
    %p19 = scmp.eq.s32.totalorder %s18, 0
    %s21 = sadd.s32 %s20, 1
    %s22 = scalar_select %p19, %s20, %s21
    %p25 = pneg %p19
    %p26 = scmp.eq.s32.totalorder %s10, 1
    %p27 = por %p25, %p26
    %p28 = scmp.ne.s32.totalorder %s20, %s23
    %p29 = scmp.eq.s32.totalorder %s10, 0
    %p30 = por %p28, %p29
    %p31 = scmp.ne.s32.totalorder %s20, %s23
    %p32 = scmp.eq.s32.totalorder %s15, 1
    %p33 = por %p31, %p32
    %p34 = scmp.ne.s32.totalorder %s23, %s24
    %p35 = scmp.eq.s32.totalorder %s15, 0
    %p36 = por %p34, %p35
    %p37 = scmp.ne.s32.totalorder %s23, %s24
    %p38 = scmp.eq.s32.totalorder %s16, 1
    %p39 = por %p37, %p38
    %p41 = scmp.ne.s32.totalorder %s24, %s40
    %p42 = scmp.eq.s32.totalorder %s16, 0
    %p43 = por %p41, %p42
    %s44 = ssub.s32 %s10, %s17
    %p45 = scmp.eq.s32.totalorder %s44, 0
    %s47 = sadd.s32 %s46, 1
    %s48 = scalar_select %p45, %s46, %s47
    %p51 = pneg %p45
    %p52 = scmp.eq.s32.totalorder %s10, 1
    %p53 = por %p51, %p52
    %p54 = scmp.ne.s32.totalorder %s46, %s49
    %p55 = scmp.eq.s32.totalorder %s10, 0
    %p56 = por %p54, %p55
    %p57 = scmp.ne.s32.totalorder %s46, %s49
    %p58 = scmp.eq.s32.totalorder %s15, 1
    %p59 = por %p57, %p58
    %p60 = scmp.ne.s32.totalorder %s49, %s50
    %p61 = scmp.eq.s32.totalorder %s15, 0
    %p62 = por %p60, %p61
    %p63 = scmp.ne.s32.totalorder %s49, %s50
    %p64 = scmp.eq.s32.totalorder %s16, 1
    %p65 = por %p63, %p64
    %p67 = scmp.ne.s32.totalorder %s50, %s66
    %p68 = scmp.eq.s32.totalorder %s16, 0
    %p69 = por %p67, %p68
    %s71 = sadd.s32 %s70, 1
    %p74 = scmp.eq.s32.totalorder %s10, 1
    %p75 = scmp.ne.s32.totalorder %s70, %s72
    %p76 = scmp.eq.s32.totalorder %s10, 0
    %p77 = por %p75, %p76
    %p78 = scmp.ne.s32.totalorder %s70, %s72
    %p79 = scmp.eq.s32.totalorder %s15, 1
    %p80 = por %p78, %p79
    %p81 = scmp.ne.s32.totalorder %s72, %s73
    %p82 = scmp.eq.s32.totalorder %s15, 0
    %p83 = por %p81, %p82
    %p84 = scmp.ne.s32.totalorder %s72, %s73
    %p85 = scmp.eq.s32.totalorder %s16, 1
    %p86 = por %p84, %p85
    %p88 = scmp.ne.s32.totalorder %s73, %s87
    %p89 = scmp.eq.s32.totalorder %s16, 0
    %p90 = por %p88, %p89
    %s92 = sadd.s32 %s91, 1
    %p95 = scmp.eq.s32.totalorder %s10, 1
    %p96 = scmp.ne.s32.totalorder %s91, %s93
    %p97 = scmp.eq.s32.totalorder %s10, 0
    %p98 = por %p96, %p97
    %p99 = scmp.ne.s32.totalorder %s91, %s93
    %p100 = scmp.eq.s32.totalorder %s15, 1
    %p101 = por %p99, %p100
    %p102 = scmp.ne.s32.totalorder %s93, %s94
    %p103 = scmp.eq.s32.totalorder %s15, 0
    %p104 = por %p102, %p103
    %p105 = scmp.ne.s32.totalorder %s93, %s94
    %p106 = scmp.eq.s32.totalorder %s16, 1
    %p107 = por %p105, %p106
    %p109 = scmp.ne.s32.totalorder %s94, %s108
    %p110 = scmp.eq.s32.totalorder %s16, 0
    %p111 = por %p109, %p110
    %s112 = ssub.s32 %s10, %s17
    %p113 = scmp.eq.s32.totalorder %s112, 0
    %s115 = sadd.s32 %s114, 1
    %s116 = scalar_select %p113, %s114, %s115
    %p119 = pneg %p113
    %p120 = scmp.eq.s32.totalorder %s10, 1
    %p121 = por %p119, %p120
    %p122 = scmp.ne.s32.totalorder %s114, %s117
    %p123 = scmp.eq.s32.totalorder %s10, 0
    %p124 = por %p122, %p123
    %p125 = scmp.ne.s32.totalorder %s114, %s117
    %p126 = scmp.eq.s32.totalorder %s15, 1
    %p127 = por %p125, %p126
    %p128 = scmp.ne.s32.totalorder %s117, %s118
    %p129 = scmp.eq.s32.totalorder %s15, 0
    %p130 = por %p128, %p129
    %p131 = scmp.ne.s32.totalorder %s117, %s118
    %p132 = scmp.eq.s32.totalorder %s16, 1
    %p133 = por %p131, %p132
    %p135 = scmp.ne.s32.totalorder %s118, %s134
    %p136 = scmp.eq.s32.totalorder %s16, 0
    %p137 = por %p135, %p136
    %p138 = scmp.le.s32.totalorder 1, %s10
    %p139 = scmp.lt.s32.totalorder %s10, 3
    %p140 = pnand %p138, %p139
    %p141 = pneg %p140
    // Predicated region
    $region9: #{fwd.1} parent=5 // pred_check
      _
    $region10: #{fwd.1} parent=5 // pred_check_branch
      %143 = sbr.rel (%p140) target = $region12
    $region11: #{fwd.1} parent=5 // pred_region
      %s144 = ssub.s32 %s10, 1
      // Predicated region
      $region13: #{fwd.1} parent=11 // pred_check
        %p145 = pneg %p83
      $region14: #{fwd.1} parent=11 // pred_check_branch
        %147 = sbr.rel (%p145) target = $region16
      $region15: #{fwd.1} parent=11 // pred_region
        _
      $region16: #{fwd.1} parent=11 // pred_fallthru
        _
      // Predicated region
      $region17: #{fwd.1} parent=11 // pred_check
        %p148 = pneg %p104
      $region18: #{fwd.1} parent=11 // pred_check_branch
        %150 = sbr.rel (%p148) target = $region20
      $region19: #{fwd.1} parent=11 // pred_region
        _
      $region20: #{fwd.1} parent=11 // pred_fallthru
        _
    $region12: #{fwd.1} parent=5 // pred_fallthru
      _
    %p151 = scmp.lt.s32.totalorder %s10, 2
    // Predicated region
    $region21: #{fwd.1} parent=5 // pred_check
      %p152 = pneg %p151
    $region22: #{fwd.1} parent=5 // pred_check_branch
      %154 = sbr.rel (%p152) target = $region24
    $region23: #{fwd.1} parent=5 // pred_region
      // Predicated region
      $region25: #{fwd.1} parent=23 // pred_check
        %p155 = pneg %p30
      $region26: #{fwd.1} parent=23 // pred_check_branch
        %157 = sbr.rel (%p155) target = $region28
      $region27: #{fwd.1} parent=23 // pred_region
        %p158 = scmp.lt.s32.totalorder %s10, 1
        %s159 = scalar_select %p158, %s10, 1
        %s160 = smul.addr %s159, 3
        %s161 = smul.addr %s160, 8
        %s162 = scalar_lea.vmem %s0, %s161
      $region28: #{fwd.1} parent=23 // pred_fallthru
        _
      // Predicated region
      $region29: #{fwd.1} parent=23 // pred_check
        %p163 = pneg %p56
      $region30: #{fwd.1} parent=23 // pred_check_branch
        %165 = sbr.rel (%p163) target = $region32
      $region31: #{fwd.1} parent=23 // pred_region
        %p166 = scmp.lt.s32.totalorder %s10, 1
        %s167 = scalar_select %p166, %s10, 1
        %s168 = smul.addr %s167, 6
        %s169 = smul.addr %s168, 8
        %s170 = scalar_lea.vmem %s1, %s169
      $region32: #{fwd.1} parent=23 // pred_fallthru
        _
    $region24: #{fwd.1} parent=5 // pred_fallthru
      _
    %p171 = scmp.le.s32.totalorder 1, %s10
    %p172 = scmp.lt.s32.totalorder %s10, 3
    %p173 = pnand %p171, %p172
    %p174 = pneg %p173
    // Predicated region
    $region33: #{fwd.1} parent=5 // pred_check
      _
    $region34: #{fwd.1} parent=5 // pred_check_branch
      %176 = sbr.rel (%p173) target = $region36
    $region35: #{fwd.1} parent=5 // pred_region
      %s177 = ssub.s32 %s10, 1
      %p178 = scmp.lt.s32.totalorder %s15, 1
      %s179 = scalar_select %p178, %s15, 1
      %s180 = smul.addr %s179, 3
      %s181 = smul.addr %s180, 8
      %s182 = scalar_lea.vmem %s0, %s181
      %p183 = pneg %p36
      %p184 = pneg %p33
      %p185 = scmp.lt.s32.totalorder %s15, 1
      %s186 = scalar_select %p185, %s15, 1
      %s187 = smul.addr %s186, 6
      %s188 = smul.addr %s187, 8
      %s189 = scalar_lea.vmem %s1, %s188
      %p190 = pneg %p62
      %p191 = pneg %p59
      %p192 = pneg %p83
      %p193 = pneg %p80
      %p194 = pneg %p104
      %p195 = pneg %p101
      %p196 = pneg %p130
      %p197 = pneg %p127
      %p198 = scmp.lt.s32.totalorder %s15, 1
      %s199 = scalar_select %p198, %s15, 1
      %s200 = smul.addr %s199, 2
      %s201 = smul.addr %s200, 8
      %s202 = scalar_lea.vmem %s4, %s201
      %p203 = scmp.lt.s32.totalorder %s15, 1
      %s204 = scalar_select %p203, %s15, 1
      %s205 = smul.addr %s204, 3
      %s206 = smul.addr %s205, 8
      %s207 = scalar_lea.vmem %s0, %s206
      %p208 = scmp.lt.s32.totalorder %s15, 1
      %s209 = scalar_select %p208, %s15, 1
      %s210 = smul.addr %s209, 6
      %s211 = smul.addr %s210, 8
      %s212 = scalar_lea.vmem %s1, %s211
      %p213 = scmp.lt.s32.totalorder %s15, 1
      %s214 = scalar_select %p213, %s15, 1
      %s215 = smul.addr %s214, 2
      %s216 = smul.addr %s215, 8
      %s217 = scalar_lea.vmem %s4, %s216
      %v219 = vld [vmem:[%s207] sm:$0xff]
      %v220 = vld [vmem:[%s207 + $0x8] sm:$0xff]
      %v221 = vld [vmem:[%s207 + $0x10] sm:$0xff]
      %v222 = vld [vmem:[%s212] sm:$0xff]
      %v223 = vld [vmem:[%s212 + $0x8] sm:$0xff]
      %v224 = vld [vmem:[%s212 + $0x10] sm:$0xff]
      %v225 = vld [vmem:[%s212 + $0x18] sm:$0xff]
      %vm226 = vcmask 195584
      %v228 = vsel %vm226, %v222, 0
      %v231 = vsel %vm226, %v223, 0
      %v234 = vsel %vm226, %v224, 0
      %v237 = vsel %vm226, %v225, 0
      %239 = vmatprep.subr.mxu0 0.0
      %240 = vmatpush1.msra.mxu0 %v219
      %241 = vmatprep.subr.mxu0 0.0
      %242 = vmatpush1.msra.mxu0 %v220
      %243 = vmatprep.subr.mxu0 0.0
      %244 = vmatpush1.msra.mxu0 %v221
      %245 = vmatprep.subr.mxu0 0.0
      %246 = vmatpush1.msra.mxu0 0.0
      %247 = vmatprep.subr.mxu0 0.0
      %248 = vmatpush1.msra.mxu0 0.0
      %249 = vmatprep.subr.mxu0 0.0
      %250 = vmatpush1.msra.mxu0 0.0
      %251 = vmatprep.subr.mxu0 0.0
      %252 = vmatpush1.msra.mxu0 0.0
      %253 = vmatprep.subr.mxu0 0.0
      %254 = vmatpush1.msra.mxu0 0.0
      %255 = vmatprep.subr.mxu0 0.0
      %256 = vmatpush1.msra.mxu0 0.0
      %257 = vmatprep.subr.mxu0 0.0
      %258 = vmatpush1.msra.mxu0 0.0
      %259 = vmatprep.subr.mxu0 0.0
      %260 = vmatpush1.msra.mxu0 0.0
      %261 = vmatprep.subr.mxu0 0.0
      %262 = vmatpush1.msra.mxu0 0.0
      %263 = vmatprep.subr.mxu0 0.0
      %264 = vmatpush1.msra.mxu0 0.0
      %265 = vmatprep.subr.mxu0 0.0
      %266 = vmatpush1.msra.mxu0 0.0
      %267 = vmatprep.subr.mxu0 0.0
      %268 = vmatpush1.msra.mxu0 0.0
      %269 = vmatprep.subr.mxu0 0.0
      %270 = vmatpush1.msra.mxu0 0.0
      %271 = vmatprep.subr.mxu0 0.0
      %272 = vmatpush1.msra.mxu0 0.0
      %273 = vmatprep.subr.mxu0 0.0
      %274 = vmatpush1.msra.mxu0 0.0
      %275 = vmatprep.subr.mxu0 0.0
      %276 = vmatpush1.msra.mxu0 0.0
      %277 = vmatprep.subr.mxu0 0.0
      %278 = vmatpush1.msra.mxu0 0.0
      %279 = vmatprep.subr.mxu0 0.0
      %280 = vmatpush1.msra.mxu0 0.0
      %281 = vmatprep.subr.mxu0 0.0
      %282 = vmatpush1.msra.mxu0 0.0
      %283 = vmatprep.subr.mxu0 0.0
      %284 = vmatpush1.msra.mxu0 0.0
      %285 = vmatprep.subr.mxu0 0.0
      %286 = vmatpush1.msra.mxu0 0.0
      %287 = vmatprep.subr.mxu0 0.0
      %288 = vmatpush1.msra.mxu0 0.0
      %289 = vmatprep.subr.mxu0 0.0
      %290 = vmatpush1.msra.mxu0 0.0
      %291 = vmatprep.subr.mxu0 0.0
      %292 = vmatpush1.msra.mxu0 0.0
      %293 = vmatprep.subr.mxu0 0.0
      %294 = vmatpush1.msra.mxu0 0.0
      %295 = vmatprep.subr.mxu0 0.0
      %296 = vmatpush1.msra.mxu0 0.0
      %297 = vmatprep.subr.mxu0 0.0
      %298 = vmatpush1.msra.mxu0 0.0
      %299 = vmatprep.subr.mxu0 0.0
      %300 = vmatpush1.msra.mxu0 0.0
      %301 = vmatprep.subr.mxu0 0.0
      %302 = vmatpush1.msra.mxu0 0.0
      %303 = vmatprep.mubr.f32.mxu0 0.0
      %304 = vmatmul.mubr.f32.gmra.mrb[0].mxu0 %v228
      %v305 = vpop.f32.mrb[0].mxu0
      %v306 = vadd.f32 0.0, %v305
      %v307 = vpop.f32.mrb[0].mxu0
      %308 = vmatprep.mubr.f32.mxu0 0.0
      %309 = vmatmul.mubr.f32.gmra.mrb[0].mxu0 %v231
      %v310 = vpop.f32.mrb[0].mxu0
      %v311 = vadd.f32 0.0, %v310
      %v312 = vpop.f32.mrb[0].mxu0
      %313 = vmatprep.mubr.f32.mxu0 0.0
      %314 = vmatmul.mubr.f32.gmra.mrb[0].mxu0 %v234
      %v315 = vpop.f32.mrb[0].mxu0
      %v316 = vadd.f32 0.0, %v315
      %v317 = vpop.f32.mrb[0].mxu0
      %318 = vmatprep.mubr.f32.mxu0 0.0
      %319 = vmatmul.mubr.f32.gmra.mrb[0].mxu0 %v237
      %v320 = vpop.f32.mrb[0].mxu0
      %v321 = vadd.f32 0.0, %v320
      %v322 = vpop.f32.mrb[0].mxu0
      %323 = vdwg.mxu0
      %v324 = vld [vmem:[%s2] sm:$0xf]
      %v325 = vld [vmem:[%s2 + $0x4] sm:$0xf]
      %v326 = vld [vmem:[%s2 + $0x8] sm:$0xf]
      %v327 = vld [vmem:[%s2 + $0xc] sm:$0xf]
      %v328 = vld [vmem:[%s2 + $0x10] sm:$0xf]
      %v329 = vld [vmem:[%s2 + $0x14] sm:$0xf]
      %v330 = vld [vmem:[%s2 + $0x18] sm:$0xf]
      %v331 = vld [vmem:[%s2 + $0x1c] sm:$0xf]
      %v332 = vpack.c.bf16 %v311, %v306
      %v333 = vpack.c.bf16 %v321, %v316
      %v338 = vunpack.c.l.b16 %v328
      %v339 = vunpack.c.l.b16 %v329
      %v340 = vunpack.c.l.b16 %v330
      %v341 = vunpack.c.l.b16 %v331
      %v342 = vpack.c.b16 %v339, %v338
      %v343 = vpack.c.b16 %v341, %v340
      %vm346 = vcmask 261120
      %v348 = vsel %vm346, %v333, 0
      %350 = vmatprep.subr.bf16.mxu0 0
      %351 = vmatpush1.bf16.msra.mxu0 %v342
      %352 = vmatprep.subr.bf16.mxu0 0
      %353 = vmatpush1.bf16.msra.mxu0 %v343
      %354 = vmatprep.subr.bf16.mxu0 0
      %355 = vmatpush1.bf16.msra.mxu0 0
      %356 = vmatprep.subr.bf16.mxu0 0
      %357 = vmatpush1.bf16.msra.mxu0 0
      %358 = vmatprep.subr.bf16.mxu0 0
      %359 = vmatpush1.bf16.msra.mxu0 0
      %360 = vmatprep.subr.bf16.mxu0 0
      %361 = vmatpush1.bf16.msra.mxu0 0
      %362 = vmatprep.subr.bf16.mxu0 0
      %363 = vmatpush1.bf16.msra.mxu0 0
      %364 = vmatprep.subr.bf16.mxu0 0
      %365 = vmatpush1.bf16.msra.mxu0 0
      %366 = vmatprep.subr.bf16.mxu0 0
      %367 = vmatpush1.bf16.msra.mxu0 0
      %368 = vmatprep.subr.bf16.mxu0 0
      %369 = vmatpush1.bf16.msra.mxu0 0
      %370 = vmatprep.subr.bf16.mxu0 0
      %371 = vmatpush1.bf16.msra.mxu0 0
      %372 = vmatprep.subr.bf16.mxu0 0
      %373 = vmatpush1.bf16.msra.mxu0 0
      %374 = vmatprep.subr.bf16.mxu0 0
      %375 = vmatpush1.bf16.msra.mxu0 0
      %376 = vmatprep.subr.bf16.mxu0 0
      %377 = vmatpush1.bf16.msra.mxu0 0
      %378 = vmatprep.subr.bf16.mxu0 0
      %379 = vmatpush1.bf16.msra.mxu0 0
      %380 = vmatprep.subr.bf16.mxu0 0
      %381 = vmatpush1.bf16.msra.mxu0 0
      %382 = vmatprep.mubr.bf16.mxu0 0
      %383 = vmatmul.mubr.bf16.gmra.mrb[0].mxu0 %v348
      %v384 = vpop.f32.mrb[0].mxu0
      %v385 = vadd.f32 0.0, %v384
      %v386 = vpop.f32.mrb[0].mxu0
      %v387 = vpop.f32.mrb[0].mxu0
      %v388 = vadd.f32 0.0, %v387
      %v389 = vpop.f32.mrb[0].mxu0
      %390 = vdwg.mxu0
      %v395 = vunpack.c.l.b16 %v324
      %v396 = vunpack.c.l.b16 %v325
      %v397 = vunpack.c.l.b16 %v326
      %v398 = vunpack.c.l.b16 %v327
      %v399 = vpack.c.b16 %v396, %v395
      %v400 = vpack.c.b16 %v398, %v397
      %v404 = vsel %vm346, %v332, 0
      %406 = vmatprep.subr.bf16.mxu0 0
      %407 = vmatpush1.bf16.msra.mxu0 %v399
      %408 = vmatprep.subr.bf16.mxu0 0
      %409 = vmatpush1.bf16.msra.mxu0 %v400
      %410 = vmatprep.subr.bf16.mxu0 0
      %411 = vmatpush1.bf16.msra.mxu0 0
      %412 = vmatprep.subr.bf16.mxu0 0
      %413 = vmatpush1.bf16.msra.mxu0 0
      %414 = vmatprep.subr.bf16.mxu0 0
      %415 = vmatpush1.bf16.msra.mxu0 0
      %416 = vmatprep.subr.bf16.mxu0 0
      %417 = vmatpush1.bf16.msra.mxu0 0
      %418 = vmatprep.subr.bf16.mxu0 0
      %419 = vmatpush1.bf16.msra.mxu0 0
      %420 = vmatprep.subr.bf16.mxu0 0
      %421 = vmatpush1.bf16.msra.mxu0 0
      %422 = vmatprep.subr.bf16.mxu0 0
      %423 = vmatpush1.bf16.msra.mxu0 0
      %424 = vmatprep.subr.bf16.mxu0 0
      %425 = vmatpush1.bf16.msra.mxu0 0
      %426 = vmatprep.subr.bf16.mxu0 0
      %427 = vmatpush1.bf16.msra.mxu0 0
      %428 = vmatprep.subr.bf16.mxu0 0
      %429 = vmatpush1.bf16.msra.mxu0 0
      %430 = vmatprep.subr.bf16.mxu0 0
      %431 = vmatpush1.bf16.msra.mxu0 0
      %432 = vmatprep.subr.bf16.mxu0 0
      %433 = vmatpush1.bf16.msra.mxu0 0
      %434 = vmatprep.subr.bf16.mxu0 0
      %435 = vmatpush1.bf16.msra.mxu0 0
      %436 = vmatprep.subr.bf16.mxu0 0
      %437 = vmatpush1.bf16.msra.mxu0 0
      %438 = vmatprep.mubr.bf16.mxu0 0
      %439 = vmatmul.mubr.bf16.gmra.mrb[0].mxu0 %v404
      %v440 = vpop.f32.mrb[0].mxu0
      %v441 = vadd.f32 %v385, %v440
      %v442 = vpop.f32.mrb[0].mxu0
      %v443 = vpop.f32.mrb[0].mxu0
      %v444 = vadd.f32 %v388, %v443
      %v445 = vpop.f32.mrb[0].mxu0
      %446 = vdwg.mxu0
      %v447 = vld [vmem:[%s3] sm:$0x1]
      %v448 = vlaneseq
      %v449 = vshrl.u32 %v448, 7
      %v450 = vsub.s32 0, %v449
      %v451 = vrot.slane %v447, %v450
      %v452 = vadd.f32 %v441, %v451
      %v453 = vadd.f32 %v444, %v451
      %v454 = vmax.f32 %v452, 0.0
      %v455 = vmax.f32 %v453, 0.0
      %v456 = vld [vmem:[%s2 + $0x20] sm:$0xf]
      %v457 = vld [vmem:[%s2 + $0x24] sm:$0xf]
      %v458 = vld [vmem:[%s2 + $0x28] sm:$0xf]
      %v459 = vld [vmem:[%s2 + $0x2c] sm:$0xf]
      %v460 = vld [vmem:[%s2 + $0x30] sm:$0xf]
      %v461 = vld [vmem:[%s2 + $0x34] sm:$0xf]
      %v462 = vld [vmem:[%s2 + $0x38] sm:$0xf]
      %v463 = vld [vmem:[%s2 + $0x3c] sm:$0xf]
      %v464 = vld [vmem:[%s2 + $0x40] sm:$0xf]
      %v465 = vld [vmem:[%s2 + $0x44] sm:$0xf]
      %v466 = vld [vmem:[%s2 + $0x48] sm:$0xf]
      %v467 = vld [vmem:[%s2 + $0x4c] sm:$0xf]
      %v468 = vld [vmem:[%s2 + $0x50] sm:$0xf]
      %v469 = vld [vmem:[%s2 + $0x54] sm:$0xf]
      %v470 = vld [vmem:[%s2 + $0x58] sm:$0xf]
      %v471 = vld [vmem:[%s2 + $0x5c] sm:$0xf]
      %v472 = vld [vmem:[%s2 + $0x60] sm:$0xf]
      %v473 = vld [vmem:[%s2 + $0x64] sm:$0xf]
      %v474 = vunpack.c.l.bf16 %v472
      %v475 = vunpack.c.l.bf16 %v473
      %v476 = vmul.f32 %v454, %v474
      %v477 = vmul.f32 %v455, %v475
      %v478 = vpack.c.bf16 %v477, %v476
      %v495 = vunpack.c.l.b16 %v456
      %v496 = vunpack.c.l.b16 %v457
      %v497 = vunpack.c.l.b16 %v458
      %v498 = vunpack.c.l.b16 %v459
      %v499 = vunpack.c.l.b16 %v460
      %v500 = vunpack.c.l.b16 %v461
      %v501 = vunpack.c.l.b16 %v462
      %v502 = vunpack.c.l.b16 %v463
      %v503 = vunpack.c.l.b16 %v464
      %v504 = vunpack.c.l.b16 %v465
      %v505 = vunpack.c.l.b16 %v466
      %v506 = vunpack.c.l.b16 %v467
      %v507 = vunpack.c.l.b16 %v468
      %v508 = vunpack.c.l.b16 %v469
      %v509 = vunpack.c.l.b16 %v470
      %v510 = vunpack.c.l.b16 %v471
      %v511 = vpack.c.b16 %v496, %v495
      %v512 = vpack.c.b16 %v498, %v497
      %v513 = vpack.c.b16 %v500, %v499
      %v514 = vpack.c.b16 %v502, %v501
      %v515 = vpack.c.b16 %v504, %v503
      %v516 = vpack.c.b16 %v506, %v505
      %v517 = vpack.c.b16 %v508, %v507
      %v518 = vpack.c.b16 %v510, %v509
      %527 = vmatprep.subr.bf16.mxu0 0
      %528 = vmatpush1.bf16.msra.mxu0 %v511
      %529 = vmatprep.subr.bf16.mxu0 0
      %530 = vmatpush1.bf16.msra.mxu0 %v512
      %531 = vmatprep.subr.bf16.mxu0 0
      %532 = vmatpush1.bf16.msra.mxu0 %v513
      %533 = vmatprep.subr.bf16.mxu0 0
      %534 = vmatpush1.bf16.msra.mxu0 %v514
      %535 = vmatprep.subr.bf16.mxu0 0
      %536 = vmatpush1.bf16.msra.mxu0 %v515
      %537 = vmatprep.subr.bf16.mxu0 0
      %538 = vmatpush1.bf16.msra.mxu0 %v516
      %539 = vmatprep.subr.bf16.mxu0 0
      %540 = vmatpush1.bf16.msra.mxu0 %v517
      %541 = vmatprep.subr.bf16.mxu0 0
      %542 = vmatpush1.bf16.msra.mxu0 %v518
      %543 = vmatprep.subr.bf16.mxu0 0
      %544 = vmatpush1.bf16.msra.mxu0 0
      %545 = vmatprep.subr.bf16.mxu0 0
      %546 = vmatpush1.bf16.msra.mxu0 0
      %547 = vmatprep.subr.bf16.mxu0 0
      %548 = vmatpush1.bf16.msra.mxu0 0
      %549 = vmatprep.subr.bf16.mxu0 0
      %550 = vmatpush1.bf16.msra.mxu0 0
      %551 = vmatprep.subr.bf16.mxu0 0
      %552 = vmatpush1.bf16.msra.mxu0 0
      %553 = vmatprep.subr.bf16.mxu0 0
      %554 = vmatpush1.bf16.msra.mxu0 0
      %555 = vmatprep.subr.bf16.mxu0 0
      %556 = vmatpush1.bf16.msra.mxu0 0
      %557 = vmatprep.subr.bf16.mxu0 0
      %558 = vmatpush1.bf16.msra.mxu0 0
      %559 = vmatprep.mubr.bf16.mxu0 0
      %560 = vmatmul.mubr.bf16.gmra.mrb[0].mxu0 %v478
      %v561 = vpop.f32.mrb[0].mxu0
      %v562 = vadd.f32 0.0, %v561
      %v563 = vpop.f32.mrb[0].mxu0
      %v564 = vpop.f32.mrb[0].mxu0
      %v565 = vadd.f32 0.0, %v564
      %v566 = vpop.f32.mrb[0].mxu0
      %567 = vdwg.mxu0
      %v568 = vld [vmem:[%s3 + $0x1] sm:$0x1]
      %v569 = vld [vmem:[%s3 + $0x2] sm:$0x1]
      %v570 = vld [vmem:[%s3 + $0x3] sm:$0x1]
      %v571 = vld [vmem:[%s3 + $0x4] sm:$0x1]
      %v572 = vld [vmem:[%s3 + $0x5] sm:$0x1]
      %v573 = vld [vmem:[%s3 + $0x6] sm:$0x1]
      %v574 = vld [vmem:[%s212 + $0x20] sm:$0xff]
      %v575 = vadd.f32 %v562, %v572
      %v576 = vxor.u32 %v575, 2147483648
      %v577 = vmul.f32 %v576, 1.442695
      %v578 = vpow.pop %v577
      %v579 = vadd.f32 %v578, 1.0
      %v580 = vrcp.pop %v579
      %v581 = vmul.f32 1.0, %v580
      %v582 = vlaneseq
      %v583 = vshrl.u32 %v582, 7
      %v584 = vsub.s32 0, %v583
      %v585 = vrot.slane %v570, %v584
      %v586 = vadd.f32 %v562, %v585
      %v587 = vxor.u32 %v586, 2147483648
      %v588 = vmul.f32 %v587, 1.442695
      %v589 = vpow.pop %v588
      %v590 = vadd.f32 %v589, 1.0
      %v591 = vrcp.pop %v590
      %v592 = vmul.f32 1.0, %v591
      %594 = vset.pattern.permute.xlu0 0
      %595 = vperm.xlu0 %594, %v574
      %v596 = vpop.permute.xlu0 %595
      %v598 = vmul.f32 %v592, %v596
      %vm599 = vcmask 1042433
      %v600 = vsel %vm599, %v598, -inf
      %v601 = vrot.slane %v600, 4
      %v602 = vmax.f32 %v600, %v601
      %v603 = vrot.slane %v602, 2
      %v604 = vmax.f32 %v602, %v603
      %v605 = vrot.slane %v604, 1
      %v606 = vmax.f32 %v604, %v605
      %vm607 = vcmask 1044483
      %v608 = vsel %vm607, %v598, -inf
      %v609 = vrot.slane %v608, 4
      %v610 = vmax.f32 %v608, %v609
      %v611 = vrot.slane %v610, 2
      %v612 = vmax.f32 %v610, %v611
      %v613 = vrot.slane %v612, 1
      %v614 = vmax.f32 %v612, %v613
      %v615 = vadd.f32 %v606, %v614
      %vm616 = vcmask 1046533
      %v617 = vsel %vm616, %v598, -inf
      %v618 = vrot.slane %v617, 4
      %v619 = vmax.f32 %v617, %v618
      %v620 = vrot.slane %v619, 2
      %v621 = vmax.f32 %v619, %v620
      %v622 = vrot.slane %v621, 1
      %v623 = vmax.f32 %v621, %v622
      %v624 = vadd.f32 %v615, %v623
      %v625 = vmul.f32 %v624, 0.33333334
      %v626 = vmul.f32 %v568, %v625
      %v627 = vmul.f32 %v569, %v581
      %v628 = vadd.f32 %v626, %v627
      %v629 = vlaneseq
      %v630 = vshrl.u32 %v629, 7
      %v631 = vsub.s32 0, %v630
      %v632 = vrot.slane %v571, %v631
      %v633 = vadd.f32 %v562, %v632
      %v634 = vadd.f32 %v565, %v632
      %v635 = vlaneseq
      %v636 = vshrl.u32 %v635, 7
      %v637 = vsub.s32 0, %v636
      %v638 = vrot.slane %v573, %v637
      %v639 = vadd.f32 %v565, %v638
      %vm642 = vcmask 1040384
      %v643 = vrot.slane %v633, 7
      %v644 = vrot.slane %v634, 7
      %v645 = vsel %vm642, %v643, %v644
      %v648 = vrot.slane %v639, 7
      %vm650 = vcmask 1042432
      %v651 = vsel %vm650, %v645, %v648
      %vm652 = vcmask 1045504
      %v653 = vsel %vm652, %v651, -inf
      %v654 = vrot.slane %v653, 4
      %v655 = vmax.f32 %v653, %v654
      %v656 = vrot.slane %v655, 2
      %v657 = vmax.f32 %v655, %v656
      %v658 = vrot.slane %v657, 1
      %v659 = vmax.f32 %v657, %v658
      %v660 = vsub.f32 %v651, %v659
      %v661 = vmul.f32 %v660, 1.442695
      %v662 = vpow.pop %v661
      %v663 = vsel %vm652, %v662, 0.0
      %v664 = vrot.slane %v663, 4
      %v665 = vadd.f32 %v663, %v664
      %v666 = vrot.slane %v665, 2
      %v667 = vadd.f32 %v665, %v666
      %v668 = vrot.slane %v667, 1
      %v669 = vadd.f32 %v667, %v668
      %v670 = vrcp.pop %v669
      %v671 = vmul.f32 %v662, %v670
      %v673 = vrot.slane %v671, 1
      %v675 = vsel %vm642, %v628, %v592
      %vm676 = vcmask 1046528
      %v677 = vsel %vm676, %v675, %v673
      %vm678 = vcmask 1044480
      %v679 = vsel %vm678, %v673, 0.0
      %680 = vst [vmem:[%s217] sm:$0xff] %v677
      %681 = vst [vmem:[%s217 + $0x8] sm:$0xff] %v679
      %p682 = scmp.lt.s32.totalorder %s15, 1
      %s683 = scalar_select %p682, %s15, 1
      %s684 = smul.addr %s683, 2
      %s685 = smul.addr %s684, 8
      %s686 = scalar_lea.vmem %s4, %s685
      // Predicated region
      $region37: #{fwd.1} parent=35 // pred_check
        %p687 = pneg %p127
      $region38: #{fwd.1} parent=35 // pred_check_branch
        %689 = sbr.rel (%p687) target = $region40
      $region39: #{fwd.1} parent=35 // pred_region
        _
      $region40: #{fwd.1} parent=35 // pred_fallthru
        _
    $region36: #{fwd.1} parent=5 // pred_fallthru
      _
    %p690 = scmp.le.s32.totalorder 2, %s10
    // Predicated region
    $region41: #{fwd.1} parent=5 // pred_check
      %p691 = pneg %p690
    $region42: #{fwd.1} parent=5 // pred_check_branch
      %693 = sbr.rel (%p691) target = $region44
    $region43: #{fwd.1} parent=5 // pred_region
      %s694 = ssub.s32 %s10, 2
      // Predicated region
      $region45: #{fwd.1} parent=43 // pred_check
        %p695 = pneg %p133
      $region46: #{fwd.1} parent=43 // pred_check_branch
        %697 = sbr.rel (%p695) target = $region48
      $region47: #{fwd.1} parent=43 // pred_region
        %p698 = scmp.lt.s32.totalorder %s16, 1
        %s699 = scalar_select %p698, %s16, 1
        %s700 = smul.addr %s699, 2
        %s701 = smul.addr %s700, 8
        %s702 = scalar_lea.vmem %s4, %s701
      $region48: #{fwd.1} parent=43 // pred_fallthru
        _
    $region44: #{fwd.1} parent=5 // pred_fallthru
      _
  $region6: #{fwd.1} parent=0 // loop_footer
    %s14 = sadd.s32 1, %s10
  $region7: #{fwd.1} parent=0 // loop_footer_branch
    %9 = sbr.rel target = $region3
  $region8: #{fwd.1} parent=0 // loop_exit
    _

</llo_original>
